<compile_context>
chip_gen: v7x
topology: tpu7x:2x2x1
jax: 0.10.0
libtpu: 0.0.40
codegen_flags: <defaults>
</compile_context>

<pallas_src>
import math

import jax
import jax.numpy as jnp
from jax.experimental import pallas as pl
from jax.experimental.pallas import tpu as pltpu


def _anet_kernel(x_ref, w_ref, b_ref, out_ref):
    """One batch tile.

    x_ref  : (T, F) input dtype, VMEM -- natural layout, batch on sublanes
    w_ref  : (1, F) f32, VMEM         -- lane-dense Linear weight row
    b_ref  : (1,)   f32, SMEM         -- Linear bias (scalar)
    out_ref: (T, 1) f32, VMEM         -- sigmoid(x @ W.T + b) for this tile
    """
    x = x_ref[...].astype(jnp.float32)                       # upcast after the DMA
    z = jnp.sum(x * w_ref[...], axis=-1, keepdims=True)      # VPU mul + lane reduce
    z = z + b_ref[0]
    e = jnp.exp(-z)                                          # EUP exp
    out_ref[...] = pl.reciprocal(1.0 + e, approx=True)       # EUP recip -> sigmoid


def _choose_tile_rows(n_rows, feat, itemsize, vmem_budget_bytes):
    """Pick the batch-tile row count from a per-row VMEM byte model."""
    # double-buffered x block + (conservatively) two full-width f32 temporaries
    # (upcast copy and x*w product) + per-row accumulator/output bytes.
    per_row = 2 * feat * itemsize + 8 * feat + 16
    t = int(vmem_budget_bytes // max(per_row, 1))
    t = max(8, min(t, 1 << 16))
    # Keep >= 2 grid steps on batches big enough to split, so v7x's two
    # TensorCores both get work from the "parallel" axis.
    if n_rows >= 256:
        t = min(t, (n_rows + 1) // 2)
    t = min(t, n_rows)
    return max(8, (t // 8) * 8)          # sublane-aligned, <= n_rows


def anet_forward(x, weight, bias, *, vmem_budget_bytes=20 * 1024 * 1024):
    """Pallas implementation of ANet.forward(x).

    x      : (..., F) float array (bf16 stays bf16 -- halves HBM read traffic).
    weight : (1, F) or (F,) array (PyTorch nn.Linear weight layout).
    bias   : (1,) array.
    returns: (..., 1) float32, sigmoid(x @ weight.T + bias).
    """
    x = jnp.asarray(x)
    if not jnp.issubdtype(x.dtype, jnp.floating):
        x = x.astype(jnp.float32)

    *lead, F = x.shape
    N = int(math.prod(lead)) if lead else 1
    x2 = x.reshape(N, F)                                   # free (contiguous) reshape

    weight = jnp.asarray(weight, jnp.float32).reshape(1, F)
    bias = jnp.asarray(bias, jnp.float32).reshape(1)

    # Tiny batches: pad rows up to the 8-sublane granule (negligible).  Larger
    # batches are tiled with NO pad / NO transpose / NO upcast copy of x in HBM.
    if N < 8:
        x_in = jnp.pad(x2, ((0, 8 - N), (0, 0)))
        n_rows = 8
    else:
        x_in = x2
        n_rows = N

    itemsize = x_in.dtype.itemsize
    tile_rows = _choose_tile_rows(n_rows, F, itemsize, vmem_budget_bytes)
    num_tiles = (n_rows + tile_rows - 1) // tile_rows
    # TODO(synk): for extremely large F (where even 8 rows exceed the VMEM
    # budget) add an inner feature-chunk grid axis with an accumulator scratch.

    out = pl.pallas_call(
        _anet_kernel,
        out_shape=jax.ShapeDtypeStruct((n_rows, 1), jnp.float32),
        grid=(num_tiles,),
        in_specs=[
            # x: natural layout, one multi-MiB row-tile per grid step.
            # (pipeline_mode=pl.Buffered(3) is available here if profiling ever
            #  shows exposed DMA; default double-buffering already hides it.)
            pl.BlockSpec((tile_rows, F), lambda i: (i, 0)),
            # weight: lane-dense (1, F), constant index map -> resident, no re-DMA.
            pl.BlockSpec((1, F), lambda i: (0, 0)),
            # bias: scalar in SMEM.
            pl.BlockSpec(memory_space=pltpu.MemorySpace.SMEM),
        ],
        out_specs=pl.BlockSpec((tile_rows, 1), lambda i: (i, 0)),
        compiler_params=pltpu.CompilerParams(
            dimension_semantics=("parallel",),
            vmem_limit_bytes=32 * 1024 * 1024,
        ),
        cost_estimate=pl.CostEstimate(
            flops=2 * n_rows * F,
            transcendentals=n_rows,
            # Honest HBM traffic: x once in its native dtype + weight + bias + output.
            bytes_accessed=n_rows * F * itemsize + F * 4 + 4 + n_rows * 4,
        ),
    )(x_in, weight, bias)

    out = out if n_rows == N else out[:N]
    return out.reshape(tuple(lead) + (1,))


if __name__ == "__main__":
    # Small deterministic setup consistent with ANet(in_feature).
    in_feature = 32
    N = 8

    key = jax.random.PRNGKey(0)
    kx, kw, kb = jax.random.split(key, 3)

    x = jax.random.normal(kx, (N, in_feature), dtype=jnp.float32)

    # nn.Linear default init: U(-1/sqrt(in_feature), 1/sqrt(in_feature))
    bound = float(in_feature) ** -0.5
    weight = jax.random.uniform(kw, (1, in_feature), jnp.float32, -bound, bound)
    bias = jax.random.uniform(kb, (1,), jnp.float32, -bound, bound)

    out = anet_forward(x, weight, bias)
    out = jax.block_until_ready(out)

    # Pure-JAX reference mirroring the PyTorch forward.
    ref = 1.0 / (1.0 + jnp.exp(-(x @ weight.T + bias)))
    assert out.shape == (N, 1), out.shape
    # Tolerance accounts for the approximate EUP reciprocal in the sigmoid.
    assert jnp.allclose(out, ref, atol=5e-3, rtol=5e-3), (out, ref)

    print("KERNEL_OK")
</pallas_src>

<mosaic_0001>
module attributes {stable_mosaic.version = 11 : i64} {
  func.func @_anet_kernel(%arg0: i32, %arg1: memref<8x32xf32, #tpu.memory_space<vmem>>, %arg2: memref<1x32xf32, #tpu.memory_space<vmem>>, %arg3: memref<1xf32, #tpu.memory_space<smem>>, %arg4: memref<8x1xf32, #tpu.memory_space<vmem>>) attributes {dimension_semantics = [#tpu.dimension_semantics<parallel>], iteration_bounds = array<i64: 1>, scalar_prefetch = 0 : i64, scratch_operands = 0 : i64, tpu.core_type = #tpu.core_type<tc>, window_params = [{transform_indices = @transform_0, window_bounds = array<i64: 8, 32>}, {pipeline_mode = #tpu.pipeline_mode<synchronous>, transform_indices = @transform_1, window_bounds = array<i64: 1, 32>}, {transform_indices = @transform_2, window_bounds = array<i64: 1>}, {transform_indices = @transform_3, window_bounds = array<i64: 8, 1>}]} {
    %c0 = arith.constant 0 : index
    %c0_0 = arith.constant 0 : index
    %0 = vector.load %arg1[%c0, %c0_0] : memref<8x32xf32, #tpu.memory_space<vmem>>, vector<8x32xf32>
    %c0_1 = arith.constant 0 : index
    %c0_2 = arith.constant 0 : index
    %1 = vector.load %arg2[%c0_1, %c0_2] : memref<1x32xf32, #tpu.memory_space<vmem>>, vector<1x32xf32>
    %2 = vector.broadcast %1 : vector<1x32xf32> to vector<8x32xf32>
    %3 = arith.mulf %0, %2 : vector<8x32xf32>
    %cst = arith.constant dense<0.000000e+00> : vector<8xf32>
    %4 = vector.multi_reduction <add>, %3, %cst [1] : vector<8x32xf32> to vector<8xf32>
    %5 = vector.shape_cast %4 : vector<8xf32> to vector<8x1xf32>
    %c0_3 = arith.constant 0 : index
    %6 = memref.load %arg3[%c0_3] : memref<1xf32, #tpu.memory_space<smem>>
    %7 = vector.broadcast %6 : f32 to vector<8x1xf32>
    %8 = arith.addf %5, %7 : vector<8x1xf32>
    %cst_4 = arith.constant 0.000000e+00 : f32
    %9 = vector.broadcast %cst_4 : f32 to vector<8x1xf32>
    %10 = arith.subf %9, %8 : vector<8x1xf32>
    %11 = math.exp %10 : vector<8x1xf32>
    %cst_5 = arith.constant 1.000000e+00 : f32
    %12 = vector.broadcast %cst_5 : f32 to vector<8x1xf32>
    %13 = arith.addf %12, %11 : vector<8x1xf32>
    %14 = tpu.reciprocal %13 {approx = true} : vector<8x1xf32> -> vector<8x1xf32>
    %c0_6 = arith.constant 0 : index
    %c0_7 = arith.constant 0 : index
    %15 = vector.load %arg4[%c0_6, %c0_7] : memref<8x1xf32, #tpu.memory_space<vmem>>, vector<8x1xf32>
    tpu.vector_store %arg4[%c0_6, %c0_7], %14 {strides = array<i32>} : memref<8x1xf32, #tpu.memory_space<vmem>>, vector<8x1xf32>,
    return
  }
  func.func @transform_0(%arg0: i32) -> (i32, i32) {
    %c0_i32 = arith.constant 0 : i32
    %c0_i32_0 = arith.constant 0 : i32
    return %arg0, %c0_i32 : i32, i32
  }
  func.func @transform_1(%arg0: i32) -> (i32, i32) {
    %c0_i32 = arith.constant 0 : i32
    %c0_i32_0 = arith.constant 0 : i32
    %c0_i32_1 = arith.constant 0 : i32
    return %c0_i32, %c0_i32_0 : i32, i32
  }
  func.func @transform_2(%arg0: i32) -> i32 {
    %c0_i32 = arith.constant 0 : i32
    %c0_i32_0 = arith.constant 0 : i32
    return %c0_i32 : i32
  }
  func.func @transform_3(%arg0: i32) -> (i32, i32) {
    %c0_i32 = arith.constant 0 : i32
    %c0_i32_0 = arith.constant 0 : i32
    return %arg0, %c0_i32 : i32, i32
  }
}

</mosaic_0001>

<llo_original>
// kernel: tpu_custom_call.1
$region0: #{tpu_custom_call.1}
  #allocation0 [shape = 'u32[]', space=smem, size = 0x4, offset = 0x4, fixed_abs, tag = 'smem constant byte address 0x4 - core index']
  #allocation1 [shape = 'u32[144,128]{1,0:T(1,128)}', space=vmem, size = 0x12000, scoped, tag = 'internal scratch']
  #allocation2 [shape = 'f32[1]{0:T(128)S(6)}', space=smem, size = 0x200, scoped, tag = 'scoped memory for tpu_custom_call.1']
  %s0 = inlined_call_operand.hbm [shape: f32[8,32], index: 0, kind: input, shape index: {}]
  %s1 = inlined_call_operand.vmem [shape: f32[1,32], index: 1, kind: input, shape index: {}]
  %s2 = inlined_call_operand.<no memory space> [shape: f32[1], index: 2, kind: input, shape index: {}]
  %s3 = inlined_call_operand.vmem [shape: f32[8,1], index: 3, kind: output, shape index: {}]
  %s4 = sld [smem:[#allocation0]]
  $region26: #{tpu_custom_call.1} parent=0
    _
  %s6 = ssub.s32 1, %s4
  %s7 = scalar_select 0, %s6, %s4
  %8 = sst [smem:[#allocation2]] %s2
  $region1: #{tpu_custom_call.1} parent=0
    #allocation3 [shape = 'u8[4096]{0}', space=vmem, size = 0x1000, scoped, tag = 'input window, operand 0, single buffered']
    #allocation4 [shape = 's32[1]{0}', space=sflag, size = 0x4, scoped, tag = 'scoped memory for tpu_custom_call.1']
    %9 = vsyncpa [#allocation4], 0
    // Predicated region
    $region2: #{tpu_custom_call.1} parent=1 // pred_check
      _
    $region3: #{tpu_custom_call.1} parent=1 // pred_check_branch
      %11 = sbr.rel (0) target = $region5
    $region4: #{tpu_custom_call.1} parent=1 // pred_region
      %s13 = ssub.s32 128, 128
      %14 = vsyncadd [#allocation4], %s13
      %s16 = sshll.u32 [#allocation3], 4
      %s17 = int_to_ptr.vmem [resolvable:$true] %s16
      %19 = dma.hbm_to_vmem [thread:$0]  %s0, 128, %s17, [#allocation4]
    $region5: #{tpu_custom_call.1} parent=1 // pred_fallthru
      _
    // Predicated region
    $region6: #{tpu_custom_call.1} parent=1 // pred_check
      _
    $region7: #{tpu_custom_call.1} parent=1 // pred_check_branch
      %21 = sbr.rel (0) target = $region9
    $region8: #{tpu_custom_call.1} parent=1 // pred_region
      _
    $region9: #{tpu_custom_call.1} parent=1 // pred_fallthru
      _
    // Predicated region
    $region10: #{tpu_custom_call.1} parent=1 // pred_check
      _
    $region11: #{tpu_custom_call.1} parent=1 // pred_check_branch
      %23 = sbr.rel (0) target = $region13
    $region12: #{tpu_custom_call.1} parent=1 // pred_region
      _
    $region13: #{tpu_custom_call.1} parent=1 // pred_fallthru
      _
    // Predicated region
    $region14: #{tpu_custom_call.1} parent=1 // pred_check
      _
    $region15: #{tpu_custom_call.1} parent=1 // pred_check_branch
      %25 = sbr.rel (0) target = $region17
    $region16: #{tpu_custom_call.1} parent=1 // pred_region
      %26 = dma.done [#allocation4], 128
    $region17: #{tpu_custom_call.1} parent=1 // pred_fallthru
      _
    %v27 = vld [vmem:[#allocation3] sm:$0xff]
    %v28 = vld [vmem:[%s1] sm:$0x1]
    %v30 = vlaneseq
    %v31 = vshrl.u32 %v30, 7
    %v32 = vsub.s32 0, %v31
    %v33 = vrot.slane %v28, %v32
    %v35 = vmul.f32 %v27, %v33
    %vm36 = vcmask 261120
    %v37 = vsel %vm36, %v35, 0.0
    %38 = vadd.xlane.f32.xlu0 %v37
    %v39 = vpop.xlane.xlu0 %38
    %s40 = sld [smem:[#allocation2]]
    %v41 = vstv %s40
    %v42 = vadd.f32 %v39, %v41
    %v43 = vsub.f32 0.0, %v42
    %v44 = vmul.f32 %v43, 1.442695
    %v45 = vpow.pop %v44
    %v46 = vadd.f32 %v45, 1.0
    %v47 = vrcp.pop %v46
    %vm48 = vcmask 7168
    %49 = vst.msk [vmem:[%s3] sm:$0xff] %vm48, %v47
    // Predicated region
    $region18: #{tpu_custom_call.1} parent=1 // pred_check
      _
    $region19: #{tpu_custom_call.1} parent=1 // pred_check_branch
      %51 = sbr.rel (0) target = $region21
    $region20: #{tpu_custom_call.1} parent=1 // pred_region
      _
    $region21: #{tpu_custom_call.1} parent=1 // pred_fallthru
      _
    // Predicated region
    $region22: #{tpu_custom_call.1} parent=1 // pred_check
      _
    $region23: #{tpu_custom_call.1} parent=1 // pred_check_branch
      %53 = sbr.rel (0) target = $region25
    $region24: #{tpu_custom_call.1} parent=1 // pred_region
      _
    $region25: #{tpu_custom_call.1} parent=1 // pred_fallthru
      _
    %54 = vsyncpa [#allocation4], 1

</llo_original>
